<compile_context>
chip_gen: v6e
topology: v6e:2x2x1
jax: 0.10.0
libtpu: 0.0.40
codegen_flags: <defaults>
</compile_context>

<pallas_src>
import math

import jax
import jax.numpy as jnp
import numpy as np
from jax.experimental import pallas as pl
from jax.experimental.pallas import tpu as pltpu


def token_embed_kernel(x_ref, w_ref, o_ref):
    # x_ref: (tile_m, 3*c_in)  im2col'd rows [x[t-1] | x[t] | x[t+1]]
    # w_ref: (3*c_in, d_model) stacked conv taps [W0; W1; W2], resident across grid
    # o_ref: (tile_m, d_model) output tile (lane-dense when d_model % 128 == 0)
    o_ref[...] = jnp.dot(
        x_ref[...], w_ref[...], preferred_element_type=jnp.float32
    ).astype(o_ref.dtype)


def _round_up(n, m):
    return ((n + m - 1) // m) * m


def _pick_tile_m(M, target=512):
    # Mem-bound tiling sweet spot is 512-1024 rows; small problems get one
    # 8-row-aligned tile. No divisibility requirement (M is padded to the tile).
    return min(target, _round_up(M, 8))


def prepare_weight(weight_pt):
    """PyTorch Conv1d weight (d_model, c_in, 3) -> stacked taps (3*c_in, d_model).

    Done once outside the hot path. Row k*c_in + c multiplies channel c of
    x[t - 1 + k] (circular), matching Conv1d(kernel_size=3, padding=1,
    padding_mode='circular', bias=False).
    """
    d_model, c_in, k = weight_pt.shape
    assert k == 3
    return (
        jnp.transpose(weight_pt, (2, 1, 0))
        .reshape(3 * c_in, d_model)
        .astype(jnp.float32)
    )


def token_embedding(x, w_stacked, *, tile_m=None, compute_dtype=None, out_dtype=None):
    """x: (B, L, c_in); w_stacked: (3*c_in, d_model) from prepare_weight().

    compute_dtype: optional cast of the im2col'd input and weights (e.g. bf16;
                   accumulation stays f32 via preferred_element_type).
    out_dtype:     output dtype (default: x.dtype).
    """
    B, L, C = x.shape
    K3, D = w_stacked.shape
    assert K3 == 3 * C
    if out_dtype is None:
        out_dtype = x.dtype

    # im2col in the wrapper (plain XLA): circular 3-tap unfold along L.
    #   x_unf[b, t] = [x[b, t-1] | x[b, t] | x[b, t+1]]   (circular in t)
    x_unf = jnp.concatenate(
        [jnp.roll(x, 1, axis=1), x, jnp.roll(x, -1, axis=1)], axis=-1
    )  # (B, L, 3C)

    # Flatten (B, L) -> M rows; each output row depends only on its own x_unf row.
    M = B * L
    x_unf = x_unf.reshape(M, K3)

    if tile_m is None:
        tile_m = _pick_tile_m(M)
    assert tile_m % 8 == 0, "tile_m must be a multiple of 8"

    # Pad M up to a multiple of tile_m (zero rows; output rows sliced off below).
    num_tiles = pl.cdiv(M, tile_m)
    M_pad = num_tiles * tile_m
    if M_pad != M:
        x_unf = jnp.pad(x_unf, ((0, M_pad - M), (0, 0)))

    w_use = w_stacked
    if compute_dtype is not None:
        x_unf = x_unf.astype(compute_dtype)
        w_use = w_stacked.astype(compute_dtype)

    out = pl.pallas_call(
        token_embed_kernel,
        out_shape=jax.ShapeDtypeStruct((M_pad, D), out_dtype),
        grid_spec=pltpu.PrefetchScalarGridSpec(
            num_scalar_prefetch=0,
            grid=(num_tiles,),
            in_specs=[
                # Per-tile im2col'd input rows: small (tile_m, 3C) block, pipelined.
                pl.BlockSpec((tile_m, K3), lambda i: (i, 0)),
                # Stacked weights: same block index every step -> resident, no re-DMA.
                pl.BlockSpec((K3, D), lambda i: (0, 0)),
            ],
            out_specs=pl.BlockSpec((tile_m, D), lambda i: (i, 0)),
        ),
        compiler_params=pltpu.CompilerParams(
            dimension_semantics=("parallel",),
        ),
    )(x_unf, w_use)

    return out[:M].reshape(B, L, D)


def ref_token_embedding(x, weight_pt):
    """Pure-JAX reference matching nn.Conv1d(..., padding=1, padding_mode='circular')."""
    x_ncl = jnp.transpose(x, (0, 2, 1))  # (B, C, L)
    x_pad = jnp.concatenate([x_ncl[:, :, -1:], x_ncl, x_ncl[:, :, :1]], axis=-1)
    y = jax.lax.conv_general_dilated(
        x_pad, weight_pt, window_strides=(1,), padding="VALID",
        dimension_numbers=("NCH", "OIH", "NCH"))
    return jnp.transpose(y, (0, 2, 1))  # (B, L, D)


def make_weight(key, c_in, d_model):
    """Deterministic kaiming_normal_(mode='fan_in', nonlinearity='leaky_relu')."""
    fan_in = c_in * 3
    neg_slope = 0.01  # PyTorch default leaky_relu slope used by kaiming_normal_
    gain = math.sqrt(2.0 / (1.0 + neg_slope ** 2))
    std = gain / math.sqrt(fan_in)
    return std * jax.random.normal(key, (d_model, c_in, 3), dtype=jnp.float32)


if __name__ == "__main__":
    key = jax.random.PRNGKey(0)
    kx, kw, kx2 = jax.random.split(key, 3)

    # Small but representative: d_model a multiple of 128 -> lane-dense stores.
    B, L, C_IN, D_MODEL = 2, 16, 4, 128
    x = jax.random.normal(kx, (B, L, C_IN), dtype=jnp.float32)
    weight = make_weight(kw, C_IN, D_MODEL)   # PyTorch Conv1d layout (D, C, 3)
    w_stacked = prepare_weight(weight)        # done once, outside the hot path

    # Case 1: default tiling (single 8-row-aligned tile for this tiny M).
    out = jax.block_until_ready(token_embedding(x, w_stacked))
    ref = jax.block_until_ready(ref_token_embedding(x, weight))
    np.testing.assert_allclose(np.asarray(out), np.asarray(ref), rtol=1e-5, atol=1e-5)

    # Case 2: odd L so M = B*L = 26 is not a tile multiple, plus a forced small
    # tile -> exercises the pad-to-tile path and a multi-block (4-step) grid,
    # and the circular wrap across tile boundaries.
    B2, L2 = 2, 13
    x2 = jax.random.normal(kx2, (B2, L2, C_IN), dtype=jnp.float32)
    out2 = jax.block_until_ready(token_embedding(x2, w_stacked, tile_m=8))
    ref2 = jax.block_until_ready(ref_token_embedding(x2, weight))
    np.testing.assert_allclose(np.asarray(out2), np.asarray(ref2), rtol=1e-5, atol=1e-5)

    print("KERNEL_OK")
</pallas_src>

<mosaic_0001>
module attributes {stable_mosaic.version = 11 : i64} {
  func.func @token_embed_kernel(%arg0: i32, %arg1: memref<32x12xf32, #tpu.memory_space<vmem>>, %arg2: memref<12x128xf32, #tpu.memory_space<vmem>>, %arg3: memref<32x128xf32, #tpu.memory_space<vmem>>) attributes {dimension_semantics = [#tpu.dimension_semantics<parallel>], iteration_bounds = array<i64: 1>, scalar_prefetch = 0 : i64, scratch_operands = 0 : i64, tpu.core_type = #tpu.core_type<tc>, window_params = [{transform_indices = @transform_0, window_bounds = array<i64: 32, 12>}, {pipeline_mode = #tpu.pipeline_mode<synchronous>, transform_indices = @transform_1, window_bounds = array<i64: 12, 128>}, {transform_indices = @transform_2, window_bounds = array<i64: 32, 128>}]} {
    %c0 = arith.constant 0 : index
    %c0_0 = arith.constant 0 : index
    %0 = vector.load %arg1[%c0, %c0_0] : memref<32x12xf32, #tpu.memory_space<vmem>>, vector<32x12xf32>
    %c0_1 = arith.constant 0 : index
    %c0_2 = arith.constant 0 : index
    %1 = vector.load %arg2[%c0_1, %c0_2] : memref<12x128xf32, #tpu.memory_space<vmem>>, vector<12x128xf32>
    %cst = arith.constant dense<0.000000e+00> : vector<32x128xf32>
    %2 = tpu.matmul %0, %1, %cst {dimension_numbers = #tpu.dot_dimension_numbers<[1], [0], [0], [1], [0, 0, 1, 1], [], []>} : vector<32x12xf32>, vector<12x128xf32>, vector<32x128xf32> -> vector<32x128xf32>
    %c0_3 = arith.constant 0 : index
    %c0_4 = arith.constant 0 : index
    %3 = vector.load %arg3[%c0_3, %c0_4] : memref<32x128xf32, #tpu.memory_space<vmem>>, vector<32x128xf32>
    tpu.vector_store %arg3[%c0_3, %c0_4], %2 {strides = array<i32>} : memref<32x128xf32, #tpu.memory_space<vmem>>, vector<32x128xf32>,
    return
  }
  func.func @transform_0(%arg0: i32) -> (i32, i32) {
    %c0_i32 = arith.constant 0 : i32
    %c0_i32_0 = arith.constant 0 : i32
    return %arg0, %c0_i32 : i32, i32
  }
  func.func @transform_1(%arg0: i32) -> (i32, i32) {
    %c0_i32 = arith.constant 0 : i32
    %c0_i32_0 = arith.constant 0 : i32
    %c0_i32_1 = arith.constant 0 : i32
    return %c0_i32, %c0_i32_0 : i32, i32
  }
  func.func @transform_2(%arg0: i32) -> (i32, i32) {
    %c0_i32 = arith.constant 0 : i32
    %c0_i32_0 = arith.constant 0 : i32
    return %arg0, %c0_i32 : i32, i32
  }
}

</mosaic_0001>

<llo_original>
// kernel: tpu_custom_call.1
$region0: #{tpu_custom_call.1}
  #allocation0 [shape = 'u32[]', space=smem, size = 0x4, offset = 0x4, fixed_abs, tag = 'smem constant byte address 0x4 - core index']
  #allocation1 [shape = 'u32[144,128]{1,0:T(1,128)}', space=vmem, size = 0x12000, scoped, tag = 'internal scratch']
  %s0 = inlined_call_operand.vmem [shape: f32[32,12], index: 0, kind: input, shape index: {}]
  %s1 = inlined_call_operand.vmem [shape: f32[12,128], index: 1, kind: input, shape index: {}]
  %s2 = inlined_call_operand.hbm [shape: f32[32,128], index: 2, kind: output, shape index: {}]
  %s3 = sld [smem:[#allocation0]]
  $region18: #{tpu_custom_call.1} parent=0
    _
  %s5 = ssub.s32 1, %s3
  %s6 = scalar_select 0, %s5, %s3
  $region1: #{tpu_custom_call.1} parent=0
    #allocation2 [shape = 'u8[16384]{0}', space=vmem, size = 0x4000, scoped, tag = 'output window, operand 0, single buffered']
    #allocation3 [shape = 's32[1]{0}', space=sflag, size = 0x4, scoped, tag = 'scoped memory for tpu_custom_call.1']
    %7 = vsyncpa [#allocation3], 0
    // Predicated region
    $region2: #{tpu_custom_call.1} parent=1 // pred_check
      _
    $region3: #{tpu_custom_call.1} parent=1 // pred_check_branch
      %9 = sbr.rel (0) target = $region5
    $region4: #{tpu_custom_call.1} parent=1 // pred_region
      _
    $region5: #{tpu_custom_call.1} parent=1 // pred_fallthru
      _
    // Predicated region
    $region6: #{tpu_custom_call.1} parent=1 // pred_check
      _
    $region7: #{tpu_custom_call.1} parent=1 // pred_check_branch
      %11 = sbr.rel (0) target = $region9
    $region8: #{tpu_custom_call.1} parent=1 // pred_region
      _
    $region9: #{tpu_custom_call.1} parent=1 // pred_fallthru
      _
    %v12 = vld [vmem:[%s0] sm:$0xff]
    %v13 = vld [vmem:[%s0 + $0x8] sm:$0xff]
    %v14 = vld [vmem:[%s0 + $0x10] sm:$0xff]
    %v15 = vld [vmem:[%s0 + $0x18] sm:$0xff]
    %v16 = vld [vmem:[%s1] sm:$0xff]
    %v17 = vld [vmem:[%s1 + $0x8] sm:$0xf]
    %vm18 = vcmask 97280
    %v20 = vsel %vm18, %v12, 0
    %v23 = vsel %vm18, %v13, 0
    %v26 = vsel %vm18, %v14, 0
    %v29 = vsel %vm18, %v15, 0
    %vm31 = vcmask 1043456
    %v33 = vsel %vm31, %v17, 0
    %35 = vmatprep.subr.mxu0 0.0
    %36 = vmatpush1.msra.mxu0 0.0
    %37 = vmatprep.subr.mxu0 0.0
    %38 = vmatpush1.msra.mxu0 0.0
    %39 = vmatprep.subr.mxu0 0.0
    %40 = vmatpush1.msra.mxu0 0.0
    %41 = vmatprep.subr.mxu0 0.0
    %42 = vmatpush1.msra.mxu0 0.0
    %43 = vmatprep.subr.mxu0 0.0
    %44 = vmatpush1.msra.mxu0 0.0
    %45 = vmatprep.subr.mxu0 0.0
    %46 = vmatpush1.msra.mxu0 0.0
    %47 = vmatprep.subr.mxu0 0.0
    %48 = vmatpush1.msra.mxu0 0.0
    %49 = vmatprep.subr.mxu0 0.0
    %50 = vmatpush1.msra.mxu0 0.0
    %51 = vmatprep.subr.mxu0 0.0
    %52 = vmatpush1.msra.mxu0 0.0
    %53 = vmatprep.subr.mxu0 0.0
    %54 = vmatpush1.msra.mxu0 0.0
    %55 = vmatprep.subr.mxu0 0.0
    %56 = vmatpush1.msra.mxu0 0.0
    %57 = vmatprep.subr.mxu0 0.0
    %58 = vmatpush1.msra.mxu0 0.0
    %59 = vmatprep.subr.mxu0 0.0
    %60 = vmatpush1.msra.mxu0 0.0
    %61 = vmatprep.subr.mxu0 0.0
    %62 = vmatpush1.msra.mxu0 0.0
    %63 = vmatprep.subr.mxu0 0.0
    %64 = vmatpush1.msra.mxu0 %v33
    %65 = vmatprep.subr.mxu0 0.0
    %66 = vmatpush1.msra.mxu0 %v16
    %67 = vmatprep.subr.mxu0 0.0
    %68 = vmatpush2.msra.mxu0 0.0
    %69 = vmatprep.subr.mxu0 0.0
    %70 = vmatpush2.msra.mxu0 0.0
    %71 = vmatprep.subr.mxu0 0.0
    %72 = vmatpush2.msra.mxu0 0.0
    %73 = vmatprep.subr.mxu0 0.0
    %74 = vmatpush2.msra.mxu0 0.0
    %75 = vmatprep.subr.mxu0 0.0
    %76 = vmatpush2.msra.mxu0 0.0
    %77 = vmatprep.subr.mxu0 0.0
    %78 = vmatpush2.msra.mxu0 0.0
    %79 = vmatprep.subr.mxu0 0.0
    %80 = vmatpush2.msra.mxu0 0.0
    %81 = vmatprep.subr.mxu0 0.0
    %82 = vmatpush2.msra.mxu0 0.0
    %83 = vmatprep.subr.mxu0 0.0
    %84 = vmatpush2.msra.mxu0 0.0
    %85 = vmatprep.subr.mxu0 0.0
    %86 = vmatpush2.msra.mxu0 0.0
    %87 = vmatprep.subr.mxu0 0.0
    %88 = vmatpush2.msra.mxu0 0.0
    %89 = vmatprep.subr.mxu0 0.0
    %90 = vmatpush2.msra.mxu0 0.0
    %91 = vmatprep.subr.mxu0 0.0
    %92 = vmatpush2.msra.mxu0 0.0
    %93 = vmatprep.subr.mxu0 0.0
    %94 = vmatpush2.msra.mxu0 0.0
    %95 = vmatprep.subr.mxu0 0.0
    %96 = vmatpush2.msra.mxu0 0.0
    %97 = vmatprep.subr.mxu0 0.0
    %98 = vmatpush2.msra.mxu0 0.0
    %99 = vmatprep.mubr.f32.mxu0 0.0
    %100 = vmatmul.mubr.f32.gmra.mxu0 %v20
    %v101 = vpop.f32.mrf.mxu0
    %v102 = vadd.f32 0.0, %v101
    %v103 = vpop.f32.mrf.mxu0
    %104 = vmatprep.mubr.f32.mxu0 0.0
    %105 = vmatmul.mubr.f32.gmra.mxu0 %v23
    %v106 = vpop.f32.mrf.mxu0
    %v107 = vadd.f32 0.0, %v106
    %v108 = vpop.f32.mrf.mxu0
    %109 = vmatprep.mubr.f32.mxu0 0.0
    %110 = vmatmul.mubr.f32.gmra.mxu0 %v26
    %v111 = vpop.f32.mrf.mxu0
    %v112 = vadd.f32 0.0, %v111
    %v113 = vpop.f32.mrf.mxu0
    %114 = vmatprep.mubr.f32.mxu0 0.0
    %115 = vmatmul.mubr.f32.gmra.mxu0 %v29
    %v116 = vpop.f32.mrf.mxu0
    %v117 = vadd.f32 0.0, %v116
    %v118 = vpop.f32.mrf.mxu0
    %119 = vdwg.mxu0
    %120 = vst [vmem:[#allocation2] sm:$0xff] %v102
    %121 = vst [vmem:[#allocation2 + $0x8] sm:$0xff] %v107
    %122 = vst [vmem:[#allocation2 + $0x10] sm:$0xff] %v112
    %123 = vst [vmem:[#allocation2 + $0x18] sm:$0xff] %v117
    // Predicated region
    $region10: #{tpu_custom_call.1} parent=1 // pred_check
      _
    $region11: #{tpu_custom_call.1} parent=1 // pred_check_branch
      %125 = sbr.rel (0) target = $region13
    $region12: #{tpu_custom_call.1} parent=1 // pred_region
      %s127 = ssub.s32 512, 512
      %128 = vsyncadd [#allocation3], %s127
      %s129 = sshll.u32 [#allocation2], 4
      %s130 = int_to_ptr.vmem [resolvable:$true] %s129
      %135 = dma.vmem_to_hbm [thread:$0]  %s130, 512, %s2, [#allocation3], 128, 128, 8
    $region13: #{tpu_custom_call.1} parent=1 // pred_fallthru
      _
    // Predicated region
    $region14: #{tpu_custom_call.1} parent=1 // pred_check
      _
    $region15: #{tpu_custom_call.1} parent=1 // pred_check_branch
      %137 = sbr.rel (0) target = $region17
    $region16: #{tpu_custom_call.1} parent=1 // pred_region
      %138 = dma.done [#allocation3], 512
    $region17: #{tpu_custom_call.1} parent=1 // pred_fallthru
      _
    %139 = vsyncpa [#allocation3], 1

</llo_original>
